<compile_context>
chip_gen: v6e
topology: v6e:2x2x1
jax: 0.10.0
libtpu: 0.0.40
codegen_flags: <defaults>
</compile_context>

<pallas_src>
import jax
import jax.numpy as jnp
from jax.experimental import pallas as pl
from jax.experimental.pallas import tpu as pltpu

_MB = 1024 * 1024


def _round_up(x, m):
    return ((x + m - 1) // m) * m


def _cdiv(a, b):
    return -(-a // b)


# --------------------------------------------------------------------------- #
# Per-generation tiling defaults
# --------------------------------------------------------------------------- #
def _tpu_defaults():
    kind = ""
    try:
        kind = jax.devices()[0].device_kind.lower()
    except Exception:
        pass
    if "v7" in kind or "tpu7" in kind:
        # 2 TCs/chip, 64 MiB VMEM/TC: smaller hidden tile, headroom below the
        # physical VMEM, and >=2 row tiles so both TensorCores get work.
        return dict(tile_n=512, tile_h=256, vmem_bytes=56 * _MB, min_row_tiles=2)
    if "v6" in kind:
        # ridge ~650 FLOP/byte -> large row tiles; 128 MiB physical VMEM.
        return dict(tile_n=1024, tile_h=512, vmem_bytes=100 * _MB, min_row_tiles=1)
    if "v5 lite" in kind or "v5e" in kind or "v5lite" in kind:
        # ridge ~240 FLOP/byte -> tile_n=256 is already near compute bound.
        return dict(tile_n=256, tile_h=512, vmem_bytes=100 * _MB, min_row_tiles=1)
    # Unknown / older generation: conservative.
    return dict(tile_n=512, tile_h=512, vmem_bytes=64 * _MB, min_row_tiles=1)


# --------------------------------------------------------------------------- #
# Kernels
# --------------------------------------------------------------------------- #
def _ffn_kernel_accum_out(x_ref, w1_ref, b1_ref, w2_ref, b2_ref, o_ref):
    """f32 output: accumulate hidden chunks directly into the resident output
    block (its BlockSpec index depends only on i) — no scratch accumulator."""
    k = pl.program_id(1)

    @pl.when(k == 0)
    def _():
        o_ref[...] = jnp.zeros_like(o_ref)

    h = jnp.dot(x_ref[...], w1_ref[...], preferred_element_type=jnp.float32)
    h = jnp.maximum(h + b1_ref[...], 0.0)          # bias + ReLU in f32
    o_ref[...] += jnp.dot(h.astype(w2_ref.dtype), w2_ref[...],
                          preferred_element_type=jnp.float32)

    @pl.when(k == pl.num_programs(1) - 1)
    def _():
        o_ref[...] += b2_ref[...]


def _ffn_kernel_scratch(x_ref, w1_ref, b1_ref, w2_ref, b2_ref, o_ref, acc_ref):
    """Non-f32 output (e.g. bf16): f32 scratch accumulator, cast at finalize."""
    k = pl.program_id(1)

    @pl.when(k == 0)
    def _():
        acc_ref[...] = jnp.zeros_like(acc_ref)

    h = jnp.dot(x_ref[...], w1_ref[...], preferred_element_type=jnp.float32)
    h = jnp.maximum(h + b1_ref[...], 0.0)
    acc_ref[...] += jnp.dot(h.astype(w2_ref.dtype), w2_ref[...],
                            preferred_element_type=jnp.float32)

    @pl.when(k == pl.num_programs(1) - 1)
    def _():
        o_ref[...] = (acc_ref[...] + b2_ref[...]).astype(o_ref.dtype)


# --------------------------------------------------------------------------- #
# Parameter preparation (pad/cast ONCE, outside the per-call path)
# --------------------------------------------------------------------------- #
def _pad_cast_2d(a, shape, dtype):
    """Zero-pad a 2-D array to `shape` and cast; skip no-op copies."""
    shape = tuple(shape)
    if a.shape == shape:
        return a if a.dtype == jnp.dtype(dtype) else a.astype(dtype)
    out = jnp.zeros(shape, dtype)
    return out.at[:a.shape[0], :a.shape[1]].set(a.astype(dtype))


def _choose_tile_h(hidden, tile_h_max):
    """Pick a multiple-of-128 hidden tile <= tile_h_max minimising padding."""
    base = _round_up(hidden, 128)
    cap = min(_round_up(max(tile_h_max, 128), 128), base)
    best_t, best_pad = 128, None
    for t in range(128, cap + 1, 128):
        pad = _round_up(base, t) - base
        if best_pad is None or pad < best_pad or (pad == best_pad and t > best_t):
            best_t, best_pad = t, pad
    return best_t, _round_up(base, best_t)


def prepare_ffn_params(w1, b1, w2, b2, *, tile_h=None, compute_dtype=jnp.bfloat16):
    """Pad + cast the FeedForward weights once.

    w1: [dim, hidden], b1: [hidden], w2: [hidden, dim], b2: [dim]
    (weights stored transposed vs. PyTorch nn.Linear.weight).
    Zero padding is exact: padded hidden units have zero weight + zero bias,
    so relu(0) = 0 contributes nothing; padded output columns are sliced off.
    """
    dim, hidden = w1.shape
    defaults = _tpu_defaults()
    tile_h_max = tile_h if tile_h is not None else defaults["tile_h"]
    tile_h_eff, hidden_pad = _choose_tile_h(hidden, tile_h_max)
    dim_pad = _round_up(dim, 128)

    return dict(
        w1=_pad_cast_2d(w1, (dim_pad, hidden_pad), compute_dtype),
        w2=_pad_cast_2d(w2, (hidden_pad, dim_pad), compute_dtype),
        b1=_pad_cast_2d(b1.reshape(1, -1), (1, hidden_pad), jnp.float32),
        b2=_pad_cast_2d(b2.reshape(1, -1), (1, dim_pad), jnp.float32),
        dim=dim, hidden=hidden, dim_pad=dim_pad, hidden_pad=hidden_pad,
        tile_h=tile_h_eff, compute_dtype=jnp.dtype(compute_dtype),
    )


# --------------------------------------------------------------------------- #
# Forward pass
# --------------------------------------------------------------------------- #
def feed_forward(x, params, *, tile_n=None, out_dtype=None):
    """x: [..., dim] -> Linear(dim, hidden) -> ReLU -> Linear(hidden, dim)."""
    defaults = _tpu_defaults()
    tile_n_max = tile_n if tile_n is not None else defaults["tile_n"]
    vmem_budget = defaults["vmem_bytes"]
    min_row_tiles = defaults["min_row_tiles"]

    dim, dim_pad = params["dim"], params["dim_pad"]
    hidden_pad, tile_h = params["hidden_pad"], params["tile_h"]
    compute_dtype = params["compute_dtype"]
    cd = compute_dtype.itemsize

    orig_shape = x.shape
    if orig_shape[-1] != dim:
        raise ValueError(f"last dim of x ({orig_shape[-1]}) != dim ({dim})")
    out_dtype = jnp.dtype(out_dtype) if out_dtype is not None else x.dtype
    od = out_dtype.itemsize
    accumulate_in_out = (out_dtype == jnp.dtype(jnp.float32))

    x2d = x.reshape(-1, dim)
    n = x2d.shape[0]

    # ---- fit tile_n into the VMEM budget -----------------------------------
    def vmem_estimate(tn):
        est = 2 * tn * dim_pad * cd                 # x (double buffered)
        est += 2 * dim_pad * tile_h * cd            # W1 chunk
        est += 2 * tile_h * dim_pad * cd            # W2 chunk
        est += 2 * (tile_h + dim_pad) * 4           # biases
        est += 2 * tn * dim_pad * od                # output
        est += tn * tile_h * 4                      # h intermediate
        if not accumulate_in_out:
            est += tn * dim_pad * 4                 # f32 scratch accumulator
        return est

    tile_n_max = max(16, _round_up(tile_n_max, 16))
    while tile_n_max > 16 and vmem_estimate(tile_n_max) > 0.85 * vmem_budget:
        tile_n_max = max(16, _round_up(tile_n_max // 2, 16))

    # ---- split rows evenly (16-row granularity), >= min_row_tiles programs --
    num_row_tiles = max(_cdiv(n, tile_n_max), min_row_tiles)
    tile_n_eff = _round_up(_cdiv(n, num_row_tiles), 16)
    n_pad = _round_up(n, tile_n_eff)
    grid = (n_pad // tile_n_eff, hidden_pad // tile_h)

    # ---- pad / cast activations only when actually needed -------------------
    need_pad = (n_pad != n) or (dim_pad != dim)
    if need_pad:
        x_p = jnp.zeros((n_pad, dim_pad), compute_dtype).at[:n, :dim].set(
            x2d.astype(compute_dtype))
    else:
        x_p = x2d if x2d.dtype == compute_dtype else x2d.astype(compute_dtype)

    # Weights are re-streamed once per row tile (index_map depends only on k
    # while i is the outer axis) -> count them grid[0] times.
    cost = pl.CostEstimate(
        flops=int(4 * n_pad * dim_pad * hidden_pad),          # two matmuls
        transcendentals=0,
        bytes_accessed=int(
            n_pad * dim_pad * cd                              # x
            + grid[0] * 2 * dim_pad * hidden_pad * cd         # W1 + W2 per row tile
            + grid[0] * (hidden_pad + dim_pad) * 4            # biases per row tile
            + n_pad * dim_pad * od))                          # out

    in_specs = [
        pl.BlockSpec((tile_n_eff, dim_pad), lambda i, k: (i, 0)),   # x rows
        pl.BlockSpec((dim_pad, tile_h), lambda i, k: (0, k)),       # W1 chunk
        pl.BlockSpec((1, tile_h), lambda i, k: (0, k)),             # b1 chunk
        pl.BlockSpec((tile_h, dim_pad), lambda i, k: (k, 0)),       # W2 chunk
        pl.BlockSpec((1, dim_pad), lambda i, k: (0, 0)),            # b2
    ]
    out_spec = pl.BlockSpec((tile_n_eff, dim_pad), lambda i, k: (i, 0))

    if accumulate_in_out:
        kernel, scratch = _ffn_kernel_accum_out, []
    else:
        kernel = _ffn_kernel_scratch
        scratch = [pltpu.VMEM((tile_n_eff, dim_pad), jnp.float32)]

    out_pad = pl.pallas_call(
        kernel,
        out_shape=jax.ShapeDtypeStruct((n_pad, dim_pad), out_dtype),
        grid_spec=pltpu.PrefetchScalarGridSpec(
            num_scalar_prefetch=0,
            grid=grid,
            in_specs=in_specs,
            out_specs=out_spec,
            scratch_shapes=scratch,
        ),
        compiler_params=pltpu.CompilerParams(
            dimension_semantics=("parallel", "arbitrary"),
            vmem_limit_bytes=int(vmem_budget)),
        cost_estimate=cost,
    )(x_p, params["w1"], params["b1"], params["w2"], params["b2"])

    out = out_pad[:n, :dim] if need_pad else out_pad
    return out.reshape(orig_shape)


# --------------------------------------------------------------------------- #
# PyTorch-style init (nn.Linear default: U(-1/sqrt(fan_in), 1/sqrt(fan_in)))
# --------------------------------------------------------------------------- #
def init_params(key, dim, hidden_dim, dtype=jnp.float32):
    k1, k2, k3, k4 = jax.random.split(key, 4)
    bound1 = 1.0 / (dim ** 0.5)
    bound2 = 1.0 / (hidden_dim ** 0.5)
    # stored transposed vs. PyTorch weight layout
    w1 = jax.random.uniform(k1, (dim, hidden_dim), dtype, -bound1, bound1)
    b1 = jax.random.uniform(k2, (hidden_dim,), dtype, -bound1, bound1)
    w2 = jax.random.uniform(k3, (hidden_dim, dim), dtype, -bound2, bound2)
    b2 = jax.random.uniform(k4, (dim,), dtype, -bound2, bound2)
    return w1, b1, w2, b2


if __name__ == "__main__":
    key = jax.random.PRNGKey(0)
    k_x, k_p = jax.random.split(key)

    # Small shapes; seq=9 exercises the row-padding path; tile_h=128 forces
    # 2 hidden chunks so the accumulator init/finalize logic runs.
    batch, seq, dim, hidden_dim = 2, 9, 128, 256
    x = jax.random.normal(k_x, (batch, seq, dim), jnp.float32)
    w1, b1, w2, b2 = init_params(k_p, dim, hidden_dim)

    # Weight padding / bf16 casting hoisted out of the per-call path.
    params = prepare_ffn_params(w1, b1, w2, b2, tile_h=128)

    # f32 output -> accumulate-directly-into-output kernel (no scratch)
    out = jax.block_until_ready(feed_forward(x, params))
    # bf16 output -> scratch-accumulator kernel
    out_bf16 = jax.block_until_ready(feed_forward(x, params, out_dtype=jnp.bfloat16))
    # aligned row count (n=32) exercises the skip-activation-padding fast path
    x2 = jax.random.normal(k_x, (2, 16, dim), jnp.float32)
    out2 = jax.block_until_ready(feed_forward(x2, params))

    # Pure-JAX reference with the same bf16 MXU inputs / f32 accumulation.
    # TODO(synk): a full-f32 MXU path (no bf16 cast) is not provided; callers
    # expecting exact f32 nn.Linear parity see ~1e-2 relative error.
    def ref_ffn(xx):
        xb = xx.reshape(-1, dim).astype(jnp.bfloat16)
        h = jnp.maximum(jnp.dot(xb, w1.astype(jnp.bfloat16),
                                preferred_element_type=jnp.float32) + b1, 0.0)
        y = jnp.dot(h.astype(jnp.bfloat16), w2.astype(jnp.bfloat16),
                    preferred_element_type=jnp.float32) + b2
        return y.reshape(xx.shape)

    ref = ref_ffn(x)
    assert out.shape == x.shape
    err = float(jnp.max(jnp.abs(out.astype(jnp.float32) - ref)))
    assert jnp.allclose(out.astype(jnp.float32), ref, atol=5e-3, rtol=5e-3), err
    assert jnp.allclose(out_bf16.astype(jnp.float32), ref, atol=5e-2, rtol=5e-2)
    assert jnp.allclose(out2.astype(jnp.float32), ref_ffn(x2), atol=5e-3, rtol=5e-3)

    print("KERNEL_OK")
</pallas_src>

<mosaic_0001>
module attributes {stable_mosaic.version = 11 : i64} {
  func.func @_ffn_kernel_accum_out(%arg0: i32, %arg1: i32, %arg2: memref<32x128xbf16, #tpu.memory_space<vmem>>, %arg3: memref<128x128xbf16, #tpu.memory_space<vmem>>, %arg4: memref<1x128xf32, #tpu.memory_space<vmem>>, %arg5: memref<128x128xbf16, #tpu.memory_space<vmem>>, %arg6: memref<1x128xf32, #tpu.memory_space<vmem>>, %arg7: memref<32x128xf32, #tpu.memory_space<vmem>>) attributes {dimension_semantics = [#tpu.dimension_semantics<parallel>, #tpu.dimension_semantics<arbitrary>], iteration_bounds = array<i64: 1, 2>, scalar_prefetch = 0 : i64, scratch_operands = 0 : i64, tpu.core_type = #tpu.core_type<tc>, window_params = [{transform_indices = @transform_0, window_bounds = array<i64: 32, 128>}, {transform_indices = @transform_1, window_bounds = array<i64: 128, 128>}, {transform_indices = @transform_2, window_bounds = array<i64: 1, 128>}, {transform_indices = @transform_3, window_bounds = array<i64: 128, 128>}, {pipeline_mode = #tpu.pipeline_mode<synchronous>, transform_indices = @transform_4, window_bounds = array<i64: 1, 128>}, {transform_indices = @transform_5, window_bounds = array<i64: 32, 128>}]} {
    %c0_i32 = arith.constant 0 : i32
    %0 = arith.cmpi eq, %arg1, %c0_i32 : i32
    %1 = arith.extui %0 : i1 to i32
    %c0_i32_0 = arith.constant 0 : i32
    %2 = arith.cmpi ne, %1, %c0_i32_0 : i32
    scf.if %2 {
      %cst_15 = arith.constant 0.000000e+00 : f32
      %20 = vector.broadcast %cst_15 : f32 to vector<32x128xf32>
      %c0_16 = arith.constant 0 : index
      %c0_17 = arith.constant 0 : index
      %21 = vector.load %arg7[%c0_16, %c0_17] : memref<32x128xf32, #tpu.memory_space<vmem>>, vector<32x128xf32>
      tpu.vector_store %arg7[%c0_16, %c0_17], %20 {strides = array<i32>} : memref<32x128xf32, #tpu.memory_space<vmem>>, vector<32x128xf32>,
    } else {
    }
    %c0 = arith.constant 0 : index
    %c0_1 = arith.constant 0 : index
    %3 = vector.load %arg2[%c0, %c0_1] : memref<32x128xbf16, #tpu.memory_space<vmem>>, vector<32x128xbf16>
    %c0_2 = arith.constant 0 : index
    %c0_3 = arith.constant 0 : index
    %4 = vector.load %arg3[%c0_2, %c0_3] : memref<128x128xbf16, #tpu.memory_space<vmem>>, vector<128x128xbf16>
    %cst = arith.constant dense<0.000000e+00> : vector<32x128xf32>
    %5 = tpu.matmul %3, %4, %cst {dimension_numbers = #tpu.dot_dimension_numbers<[1], [0], [0], [1], [0, 0, 1, 1], [], []>} : vector<32x128xbf16>, vector<128x128xbf16>, vector<32x128xf32> -> vector<32x128xf32>
    %c0_4 = arith.constant 0 : index
    %c0_5 = arith.constant 0 : index
    %6 = vector.load %arg4[%c0_4, %c0_5] : memref<1x128xf32, #tpu.memory_space<vmem>>, vector<1x128xf32>
    %7 = vector.broadcast %6 : vector<1x128xf32> to vector<32x128xf32>
    %8 = arith.addf %5, %7 : vector<32x128xf32>
    %cst_6 = arith.constant 0.000000e+00 : f32
    %9 = vector.broadcast %cst_6 : f32 to vector<32x128xf32>
    %10 = arith.maximumf %8, %9 : vector<32x128xf32>
    %c0_7 = arith.constant 0 : index
    %c0_8 = arith.constant 0 : index
    %11 = vector.load %arg7[%c0_7, %c0_8] : memref<32x128xf32, #tpu.memory_space<vmem>>, vector<32x128xf32>
    %12 = arith.truncf %10 : vector<32x128xf32> to vector<32x128xbf16>
    %c0_9 = arith.constant 0 : index
    %c0_10 = arith.constant 0 : index
    %13 = vector.load %arg5[%c0_9, %c0_10] : memref<128x128xbf16, #tpu.memory_space<vmem>>, vector<128x128xbf16>
    %cst_11 = arith.constant dense<0.000000e+00> : vector<32x128xf32>
    %14 = tpu.matmul %12, %13, %cst_11 {dimension_numbers = #tpu.dot_dimension_numbers<[1], [0], [0], [1], [0, 0, 1, 1], [], []>} : vector<32x128xbf16>, vector<128x128xbf16>, vector<32x128xf32> -> vector<32x128xf32>
    %15 = arith.addf %11, %14 : vector<32x128xf32>
    %c0_12 = arith.constant 0 : index
    %c0_13 = arith.constant 0 : index
    %16 = vector.load %arg7[%c0_12, %c0_13] : memref<32x128xf32, #tpu.memory_space<vmem>>, vector<32x128xf32>
    tpu.vector_store %arg7[%c0_12, %c0_13], %15 {strides = array<i32>} : memref<32x128xf32, #tpu.memory_space<vmem>>, vector<32x128xf32>,
    %c1_i32 = arith.constant 1 : i32
    %17 = arith.cmpi eq, %arg1, %c1_i32 : i32
    %18 = arith.extui %17 : i1 to i32
    %c0_i32_14 = arith.constant 0 : i32
    %19 = arith.cmpi ne, %18, %c0_i32_14 : i32
    scf.if %19 {
      %c0_15 = arith.constant 0 : index
      %c0_16 = arith.constant 0 : index
      %20 = vector.load %arg7[%c0_15, %c0_16] : memref<32x128xf32, #tpu.memory_space<vmem>>, vector<32x128xf32>
      %c0_17 = arith.constant 0 : index
      %c0_18 = arith.constant 0 : index
      %21 = vector.load %arg6[%c0_17, %c0_18] : memref<1x128xf32, #tpu.memory_space<vmem>>, vector<1x128xf32>
      %22 = vector.broadcast %21 : vector<1x128xf32> to vector<32x128xf32>
      %23 = arith.addf %20, %22 : vector<32x128xf32>
      %c0_19 = arith.constant 0 : index
      %c0_20 = arith.constant 0 : index
      %24 = vector.load %arg7[%c0_19, %c0_20] : memref<32x128xf32, #tpu.memory_space<vmem>>, vector<32x128xf32>
      tpu.vector_store %arg7[%c0_19, %c0_20], %23 {strides = array<i32>} : memref<32x128xf32, #tpu.memory_space<vmem>>, vector<32x128xf32>,
    } else {
    }
    return
  }
  func.func @transform_0(%arg0: i32, %arg1: i32) -> (i32, i32) {
    %c0_i32 = arith.constant 0 : i32
    %c0_i32_0 = arith.constant 0 : i32
    return %arg0, %c0_i32 : i32, i32
  }
  func.func @transform_1(%arg0: i32, %arg1: i32) -> (i32, i32) {
    %c0_i32 = arith.constant 0 : i32
    %c0_i32_0 = arith.constant 0 : i32
    return %c0_i32, %arg1 : i32, i32
  }
  func.func @transform_2(%arg0: i32, %arg1: i32) -> (i32, i32) {
    %c0_i32 = arith.constant 0 : i32
    %c0_i32_0 = arith.constant 0 : i32
    return %c0_i32, %arg1 : i32, i32
  }
  func.func @transform_3(%arg0: i32, %arg1: i32) -> (i32, i32) {
    %c0_i32 = arith.constant 0 : i32
    %c0_i32_0 = arith.constant 0 : i32
    return %arg1, %c0_i32 : i32, i32
  }
  func.func @transform_4(%arg0: i32, %arg1: i32) -> (i32, i32) {
    %c0_i32 = arith.constant 0 : i32
    %c0_i32_0 = arith.constant 0 : i32
    %c0_i32_1 = arith.constant 0 : i32
    return %c0_i32, %c0_i32_0 : i32, i32
  }
  func.func @transform_5(%arg0: i32, %arg1: i32) -> (i32, i32) {
    %c0_i32 = arith.constant 0 : i32
    %c0_i32_0 = arith.constant 0 : i32
    return %arg0, %c0_i32 : i32, i32
  }
}

</mosaic_0001>

<llo_original>
// kernel: tpu_custom_call.1
$region0: #{tpu_custom_call.1}
  #allocation0 [shape = 'u32[]', space=smem, size = 0x4, offset = 0x4, fixed_abs, tag = 'smem constant byte address 0x4 - core index']
  #allocation1 [shape = 'u32[144,128]{1,0:T(1,128)}', space=vmem, size = 0x12000, scoped, tag = 'internal scratch']
  %s0 = inlined_call_operand.hbm [shape: bf16[32,128], index: 0, kind: input, shape index: {}]
  %s1 = inlined_call_operand.hbm [shape: bf16[128,256], index: 1, kind: input, shape index: {}]
  %s2 = inlined_call_operand.vmem [shape: f32[1,256], index: 2, kind: input, shape index: {}]
  %s3 = inlined_call_operand.hbm [shape: bf16[256,128], index: 3, kind: input, shape index: {}]
  %s4 = inlined_call_operand.vmem [shape: f32[1,128], index: 4, kind: input, shape index: {}]
  %s5 = inlined_call_operand.hbm [shape: f32[32,128], index: 5, kind: output, shape index: {}]
  %s6 = sld [smem:[#allocation0]]
  $region73: #{tpu_custom_call.1} parent=0
    _
  %s8 = ssub.s32 1, %s6
  %s9 = scalar_select 0, %s8, %s6
  $region1: #{tpu_custom_call.1} parent=0
    #allocation2 [shape = 'u8[8192]{0}', space=vmem, size = 0x2000, scoped, tag = 'input window, operand 0, single buffered']
    #allocation3 [shape = 's32[2]{0}', space=sflag, size = 0x8, scoped, tag = 'scoped memory for tpu_custom_call.1']
    #allocation4 [shape = 's32[2]{0}', space=sflag, size = 0x8, scoped, tag = 'scoped memory for tpu_custom_call.1']
    #allocation5 [shape = 'u8[65536]{0}', space=vmem, size = 0x10000, scoped, tag = 'input window, operand 1']
    #allocation6 [shape = 's32[2]{0}', space=sflag, size = 0x8, scoped, tag = 'scoped memory for tpu_custom_call.1']
    #allocation7 [shape = 'u8[65536]{0}', space=vmem, size = 0x10000, scoped, tag = 'input window, operand 3']
    #allocation8 [shape = 'u8[16384]{0}', space=vmem, size = 0x4000, scoped, tag = 'output window, operand 0, single buffered']
    %10 = vsyncpa [#allocation3], 0
    %11 = vsyncpa [#allocation6], 0
    %s12 = scalar_lea.sflag [#allocation6], 1
    %13 = vsyncpa %s12, 0
    %14 = vsyncpa [#allocation4], 0
    loop: start=0, step=1, limit=4
    $region2: #{tpu_custom_call.1} parent=1 // loop_pre_header
      _
    $region3: #{tpu_custom_call.1} parent=1 // loop_header
      %s16 = sphi 0, %s20
      %p17 = scmp.ge.s32.totalorder %s16, 4
      %s23 = sphi 0, %s35
      %s24 = sphi 0, %s31
      %s25 = sphi 0, %s23
      %s26 = sphi 0, %s24
      %s27 = sphi 0, %s25
      %s28 = sphi 0, %s26
      %s38 = sphi 0, %s40
      %s41 = sphi 0, %s38
      %s42 = sphi 0, %s41
      %s58 = sphi 0, %s42
      %s64 = sphi 0, %s66
      %s67 = sphi 0, %s64
      %s68 = sphi 0, %s67
      %s84 = sphi 0, %s68
      %s90 = sphi 0, %s92
      %s93 = sphi 0, %s90
      %s94 = sphi 0, %s93
      %s110 = sphi 0, %s94
      %s116 = sphi 0, %s118
      %s119 = sphi 0, %s116
      %s120 = sphi 0, %s119
      %s136 = sphi 0, %s120
      %s140 = sphi 0, %s140
      %s142 = sphi 0, %s140
      %s143 = sphi 0, %s142
      %s157 = sphi 0, %s143
      %s163 = sphi 0, %s165
      %s166 = sphi 0, %s163
      %s167 = sphi 0, %s166
      %s183 = sphi 0, %s167
    $region4: #{tpu_custom_call.1} parent=1 // loop_header_branch
      %19 = sbr.rel (%p17) target = $region8
    $region5: #{tpu_custom_call.1} parent=1 // loop_body
      %s21 = ssub.s32 %s16, 1
      %s22 = ssub.s32 %s16, 2
      %s29 = sadd.s32 1, %s24
      %p30 = scmp.ge.s32.totalorder %s29, 2
      %s31 = scalar_select %p30, 0, %s29
      %s32 = sadd.s32 1, %s23
      %s33 = scalar_select %p30, %s32, %s23
      %p34 = scmp.ge.s32.totalorder %s33, 1
      %s35 = scalar_select %p34, 0, %s33
      %s36 = ssub.s32 %s23, %s35
      %p37 = scmp.eq.s32.totalorder %s36, 0
      %s39 = sadd.s32 %s38, 1
      %s40 = scalar_select %p37, %s38, %s39
      %p43 = pneg %p37
      %p44 = scmp.eq.s32.totalorder %s16, 1
      %p45 = por %p43, %p44
      %p46 = scmp.ne.s32.totalorder %s38, %s41
      %p47 = scmp.eq.s32.totalorder %s16, 0
      %p48 = por %p46, %p47
      %p49 = scmp.ne.s32.totalorder %s38, %s41
      %p50 = scmp.eq.s32.totalorder %s21, 1
      %p51 = por %p49, %p50
      %p52 = scmp.ne.s32.totalorder %s41, %s42
      %p53 = scmp.eq.s32.totalorder %s21, 0
      %p54 = por %p52, %p53
      %p55 = scmp.ne.s32.totalorder %s41, %s42
      %p56 = scmp.eq.s32.totalorder %s22, 1
      %p57 = por %p55, %p56
      %p59 = scmp.ne.s32.totalorder %s42, %s58
      %p60 = scmp.eq.s32.totalorder %s22, 0
      %p61 = por %p59, %p60
      %s62 = ssub.s32 %s24, %s31
      %p63 = scmp.eq.s32.totalorder %s62, 0
      %s65 = sadd.s32 %s64, 1
      %s66 = scalar_select %p63, %s64, %s65
      %p69 = pneg %p63
      %p70 = scmp.eq.s32.totalorder %s16, 1
      %p71 = por %p69, %p70
      %p72 = scmp.ne.s32.totalorder %s64, %s67
      %p73 = scmp.eq.s32.totalorder %s16, 0
      %p74 = por %p72, %p73
      %p75 = scmp.ne.s32.totalorder %s64, %s67
      %p76 = scmp.eq.s32.totalorder %s21, 1
      %p77 = por %p75, %p76
      %p78 = scmp.ne.s32.totalorder %s67, %s68
      %p79 = scmp.eq.s32.totalorder %s21, 0
      %p80 = por %p78, %p79
      %p81 = scmp.ne.s32.totalorder %s67, %s68
      %p82 = scmp.eq.s32.totalorder %s22, 1
      %p83 = por %p81, %p82
      %p85 = scmp.ne.s32.totalorder %s68, %s84
      %p86 = scmp.eq.s32.totalorder %s22, 0
      %p87 = por %p85, %p86
      %s88 = ssub.s32 %s24, %s31
      %p89 = scmp.eq.s32.totalorder %s88, 0
      %s91 = sadd.s32 %s90, 1
      %s92 = scalar_select %p89, %s90, %s91
      %p95 = pneg %p89
      %p96 = scmp.eq.s32.totalorder %s16, 1
      %p97 = por %p95, %p96
      %p98 = scmp.ne.s32.totalorder %s90, %s93
      %p99 = scmp.eq.s32.totalorder %s16, 0
      %p100 = por %p98, %p99
      %p101 = scmp.ne.s32.totalorder %s90, %s93
      %p102 = scmp.eq.s32.totalorder %s21, 1
      %p103 = por %p101, %p102
      %p104 = scmp.ne.s32.totalorder %s93, %s94
      %p105 = scmp.eq.s32.totalorder %s21, 0
      %p106 = por %p104, %p105
      %p107 = scmp.ne.s32.totalorder %s93, %s94
      %p108 = scmp.eq.s32.totalorder %s22, 1
      %p109 = por %p107, %p108
      %p111 = scmp.ne.s32.totalorder %s94, %s110
      %p112 = scmp.eq.s32.totalorder %s22, 0
      %p113 = por %p111, %p112
      %s114 = ssub.s32 %s24, %s31
      %p115 = scmp.eq.s32.totalorder %s114, 0
      %s117 = sadd.s32 %s116, 1
      %s118 = scalar_select %p115, %s116, %s117
      %p121 = pneg %p115
      %p122 = scmp.eq.s32.totalorder %s16, 1
      %p123 = por %p121, %p122
      %p124 = scmp.ne.s32.totalorder %s116, %s119
      %p125 = scmp.eq.s32.totalorder %s16, 0
      %p126 = por %p124, %p125
      %p127 = scmp.ne.s32.totalorder %s116, %s119
      %p128 = scmp.eq.s32.totalorder %s21, 1
      %p129 = por %p127, %p128
      %p130 = scmp.ne.s32.totalorder %s119, %s120
      %p131 = scmp.eq.s32.totalorder %s21, 0
      %p132 = por %p130, %p131
      %p133 = scmp.ne.s32.totalorder %s119, %s120
      %p134 = scmp.eq.s32.totalorder %s22, 1
      %p135 = por %p133, %p134
      %p137 = scmp.ne.s32.totalorder %s120, %s136
      %p138 = scmp.eq.s32.totalorder %s22, 0
      %p139 = por %p137, %p138
      %s141 = sadd.s32 %s140, 1
      %p144 = scmp.eq.s32.totalorder %s16, 1
      %p145 = scmp.ne.s32.totalorder %s140, %s142
      %p146 = scmp.eq.s32.totalorder %s16, 0
      %p147 = por %p145, %p146
      %p148 = scmp.ne.s32.totalorder %s140, %s142
      %p149 = scmp.eq.s32.totalorder %s21, 1
      %p150 = por %p148, %p149
      %p151 = scmp.ne.s32.totalorder %s142, %s143
      %p152 = scmp.eq.s32.totalorder %s21, 0
      %p153 = por %p151, %p152
      %p154 = scmp.ne.s32.totalorder %s142, %s143
      %p155 = scmp.eq.s32.totalorder %s22, 1
      %p156 = por %p154, %p155
      %p158 = scmp.ne.s32.totalorder %s143, %s157
      %p159 = scmp.eq.s32.totalorder %s22, 0
      %p160 = por %p158, %p159
      %s161 = ssub.s32 %s23, %s35
      %p162 = scmp.eq.s32.totalorder %s161, 0
      %s164 = sadd.s32 %s163, 1
      %s165 = scalar_select %p162, %s163, %s164
      %p168 = pneg %p162
      %p169 = scmp.eq.s32.totalorder %s16, 1
      %p170 = por %p168, %p169
      %p171 = scmp.ne.s32.totalorder %s163, %s166
      %p172 = scmp.eq.s32.totalorder %s16, 0
      %p173 = por %p171, %p172
      %p174 = scmp.ne.s32.totalorder %s163, %s166
      %p175 = scmp.eq.s32.totalorder %s21, 1
      %p176 = por %p174, %p175
      %p177 = scmp.ne.s32.totalorder %s166, %s167
      %p178 = scmp.eq.s32.totalorder %s21, 0
      %p179 = por %p177, %p178
      %p180 = scmp.ne.s32.totalorder %s166, %s167
      %p181 = scmp.eq.s32.totalorder %s22, 1
      %p182 = por %p180, %p181
      %p184 = scmp.ne.s32.totalorder %s167, %s183
      %p185 = scmp.eq.s32.totalorder %s22, 0
      %p186 = por %p184, %p185
      %p187 = scmp.le.s32.totalorder 1, %s16
      %p188 = scmp.lt.s32.totalorder %s16, 3
      %p189 = pnand %p187, %p188
      %p190 = pneg %p189
      // Predicated region
      $region9: #{tpu_custom_call.1} parent=5 // pred_check
        _
      $region10: #{tpu_custom_call.1} parent=5 // pred_check_branch
        %192 = sbr.rel (%p189) target = $region12
      $region11: #{tpu_custom_call.1} parent=5 // pred_region
        %s193 = ssub.s32 %s16, 1
        // Predicated region
        $region13: #{tpu_custom_call.1} parent=11 // pred_check
          %p194 = pneg %p54
        $region14: #{tpu_custom_call.1} parent=11 // pred_check_branch
          %196 = sbr.rel (%p194) target = $region16
        $region15: #{tpu_custom_call.1} parent=11 // pred_region
          %s197 = smul.u32 4, %s25
          %s199 = ssub.s32 256, 256
          %200 = vsyncadd [#allocation3], %s199
          %s201 = smul.addr %s197, 64
          %s202 = scalar_lea.hbm %s0, %s201
          %s203 = sshll.u32 [#allocation2], 4
          %s204 = int_to_ptr.vmem [resolvable:$true] %s203
          %209 = dma.hbm_to_vmem [thread:$0]  %s202, 256, %s204, [#allocation3], 64, 64, 4
        $region16: #{tpu_custom_call.1} parent=11 // pred_fallthru
          _
        // Predicated region
        $region17: #{tpu_custom_call.1} parent=11 // pred_check
          %p210 = pneg %p153
        $region18: #{tpu_custom_call.1} parent=11 // pred_check_branch
          %212 = sbr.rel (%p210) target = $region20
        $region19: #{tpu_custom_call.1} parent=11 // pred_region
          _
        $region20: #{tpu_custom_call.1} parent=11 // pred_fallthru
          _
      $region12: #{tpu_custom_call.1} parent=5 // pred_fallthru
        _
      %p213 = scmp.lt.s32.totalorder %s16, 2
      // Predicated region
      $region21: #{tpu_custom_call.1} parent=5 // pred_check
        %p214 = pneg %p213
      $region22: #{tpu_custom_call.1} parent=5 // pred_check_branch
        %216 = sbr.rel (%p214) target = $region24
      $region23: #{tpu_custom_call.1} parent=5 // pred_region
        // Predicated region
        $region25: #{tpu_custom_call.1} parent=23 // pred_check
          %p217 = pneg %p74
        $region26: #{tpu_custom_call.1} parent=23 // pred_check_branch
          %219 = sbr.rel (%p217) target = $region28
        $region27: #{tpu_custom_call.1} parent=23 // pred_region
          %s220 = sand.u32 %s16, 1
          %s221 = scalar_lea.sflag [#allocation6], %s220
          %s222 = sand.u32 %s64, 1
          %s223 = smul.addr %s222, 64
          %s224 = scalar_lea.vmem [#allocation5], %s223
          %s226 = ssub.s32 1024, 1024
          %227 = vsyncadd %s221, %s226
          %s228 = smul.addr %s24, 64
          %s229 = scalar_lea.hbm %s1, %s228
          %s230 = sshll.u32 %s224, 4
          %s231 = int_to_ptr.vmem [resolvable:$true] %s230
          %236 = dma.hbm_to_vmem [thread:$0]  %s229, 1024, %s231, %s221, 128, 64, 4
        $region28: #{tpu_custom_call.1} parent=23 // pred_fallthru
          _
        // Predicated region
        $region29: #{tpu_custom_call.1} parent=23 // pred_check
          %p237 = pneg %p100
        $region30: #{tpu_custom_call.1} parent=23 // pred_check_branch
          %239 = sbr.rel (%p237) target = $region32
        $region31: #{tpu_custom_call.1} parent=23 // pred_region
          %p240 = scmp.lt.s32.totalorder %s24, 1
          %s241 = scalar_select %p240, %s24, 1
          %s242 = scalar_lea.vmem %s2, %s241
        $region32: #{tpu_custom_call.1} parent=23 // pred_fallthru
          _
        // Predicated region
        $region33: #{tpu_custom_call.1} parent=23 // pred_check
          %p243 = pneg %p126
        $region34: #{tpu_custom_call.1} parent=23 // pred_check_branch
          %245 = sbr.rel (%p243) target = $region36
        $region35: #{tpu_custom_call.1} parent=23 // pred_region
          %s246 = sand.u32 %s16, 1
          %s247 = scalar_lea.sflag [#allocation6], %s246
          %s248 = sand.u32 %s116, 1
          %s249 = smul.addr %s248, 64
          %s250 = scalar_lea.vmem [#allocation7], %s249
          %s251 = smul.u32 16, %s24
          %s253 = ssub.s32 1024, 1024
          %254 = vsyncadd %s247, %s253
          %s255 = smul.addr %s251, 64
          %s256 = scalar_lea.hbm %s3, %s255
          %s257 = sshll.u32 %s250, 4
          %s258 = int_to_ptr.vmem [resolvable:$true] %s257
          %263 = dma.hbm_to_vmem [thread:$0]  %s256, 1024, %s258, %s247, 64, 64, 4
        $region36: #{tpu_custom_call.1} parent=23 // pred_fallthru
          _
      $region24: #{tpu_custom_call.1} parent=5 // pred_fallthru
        _
      %p264 = scmp.le.s32.totalorder 1, %s16
      %p265 = scmp.lt.s32.totalorder %s16, 3
      %p266 = pnand %p264, %p265
      %p267 = pneg %p266
      // Predicated region
      $region37: #{tpu_custom_call.1} parent=5 // pred_check
        _
      $region38: #{tpu_custom_call.1} parent=5 // pred_check_branch
        %269 = sbr.rel (%p266) target = $region40
      $region39: #{tpu_custom_call.1} parent=5 // pred_region
        %s270 = ssub.s32 %s16, 1
        // Predicated region
        $region41: #{tpu_custom_call.1} parent=39 // pred_check
          %p271 = pneg %p54
        $region42: #{tpu_custom_call.1} parent=39 // pred_check_branch
          %273 = sbr.rel (%p271) target = $region44
        $region43: #{tpu_custom_call.1} parent=39 // pred_region
          %274 = dma.done [#allocation3], 256
        $region44: #{tpu_custom_call.1} parent=39 // pred_fallthru
          _
        %s275 = sand.u32 %s21, 1
        %s276 = scalar_lea.sflag [#allocation6], %s275
        %s277 = sand.u32 %s67, 1
        %s278 = smul.addr %s277, 64
        %s279 = scalar_lea.vmem [#allocation5], %s278
        // Predicated region
        $region45: #{tpu_custom_call.1} parent=39 // pred_check
          %p280 = pneg %p80
        $region46: #{tpu_custom_call.1} parent=39 // pred_check_branch
          %282 = sbr.rel (%p280) target = $region48
        $region47: #{tpu_custom_call.1} parent=39 // pred_region
          %283 = dma.done %s276, 1024
        $region48: #{tpu_custom_call.1} parent=39 // pred_fallthru
          _
        %s284 = sand.u32 %s21, 1
        %s285 = scalar_lea.sflag [#allocation6], %s284
        %s286 = sand.u32 %s119, 1
        %s287 = smul.addr %s286, 64
        %s288 = scalar_lea.vmem [#allocation7], %s287
        // Predicated region
        $region49: #{tpu_custom_call.1} parent=39 // pred_check
          %p289 = pneg %p132
        $region50: #{tpu_custom_call.1} parent=39 // pred_check_branch
          %291 = sbr.rel (%p289) target = $region52
        $region51: #{tpu_custom_call.1} parent=39 // pred_region
          %292 = dma.done %s285, 1024
        $region52: #{tpu_custom_call.1} parent=39 // pred_fallthru
          _
        %p293 = pneg %p54
        %p294 = pneg %p51
        %s295 = sand.u32 %s21, 1
        %s296 = scalar_lea.sflag [#allocation6], %s295
        %s297 = sand.u32 %s67, 1
        %s298 = smul.addr %s297, 64
        %s299 = scalar_lea.vmem [#allocation5], %s298
        %p300 = pneg %p80
        %p301 = pneg %p77
        %p302 = scmp.lt.s32.totalorder %s26, 1
        %s303 = scalar_select %p302, %s26, 1
        %s304 = scalar_lea.vmem %s2, %s303
        %p305 = pneg %p106
        %p306 = pneg %p103
        %s307 = sand.u32 %s21, 1
        %s308 = scalar_lea.sflag [#allocation6], %s307
        %s309 = sand.u32 %s119, 1
        %s310 = smul.addr %s309, 64
        %s311 = scalar_lea.vmem [#allocation7], %s310
        %p312 = pneg %p132
        %p313 = pneg %p129
        %p314 = pneg %p153
        %p315 = pneg %p150
        %p316 = pneg %p179
        %p317 = pneg %p176
        %s318 = smul.u32 4, %s25
        %p319 = scmp.lt.s32.totalorder %s26, 1
        %s320 = scalar_select %p319, %s26, 1
        %s321 = scalar_lea.vmem %s2, %s320
        %s322 = smul.u32 16, %s26
        %s323 = smul.u32 4, %s25
        %p325 = scmp.eq.s32.totalorder %s26, 0
        // Predicated region
        $region53: #{tpu_custom_call.1} parent=39 // pred_check
          %p326 = pneg %p325
        $region54: #{tpu_custom_call.1} parent=39 // pred_check_branch
          %328 = sbr.rel (%p326) target = $region56
        $region55: #{tpu_custom_call.1} parent=39 // pred_region
          %329 = vst [vmem:[#allocation8] sm:$0xff] 0.0
          %330 = vst [vmem:[#allocation8 + $0x8] sm:$0xff] 0.0
          %331 = vst [vmem:[#allocation8 + $0x10] sm:$0xff] 0.0
          %332 = vst [vmem:[#allocation8 + $0x18] sm:$0xff] 0.0
        $region56: #{tpu_custom_call.1} parent=39 // pred_fallthru
          _
        %v333 = vld [vmem:[#allocation2] sm:$0xf]
        %v334 = vld [vmem:[#allocation2 + $0x4] sm:$0xf]
        %v335 = vld [vmem:[#allocation2 + $0x8] sm:$0xf]
        %v336 = vld [vmem:[#allocation2 + $0xc] sm:$0xf]
        %v337 = vld [vmem:[%s279] sm:$0xf]
        %v338 = vld [vmem:[%s279 + $0x4] sm:$0xf]
        %v339 = vld [vmem:[%s279 + $0x8] sm:$0xf]
        %v340 = vld [vmem:[%s279 + $0xc] sm:$0xf]
        %v341 = vld [vmem:[%s279 + $0x10] sm:$0xf]
        %v342 = vld [vmem:[%s279 + $0x14] sm:$0xf]
        %v343 = vld [vmem:[%s279 + $0x18] sm:$0xf]
        %v344 = vld [vmem:[%s279 + $0x1c] sm:$0xf]
        %v345 = vld [vmem:[%s279 + $0x20] sm:$0xf]
        %v346 = vld [vmem:[%s279 + $0x24] sm:$0xf]
        %v347 = vld [vmem:[%s279 + $0x28] sm:$0xf]
        %v348 = vld [vmem:[%s279 + $0x2c] sm:$0xf]
        %v349 = vld [vmem:[%s279 + $0x30] sm:$0xf]
        %v350 = vld [vmem:[%s279 + $0x34] sm:$0xf]
        %v351 = vld [vmem:[%s279 + $0x38] sm:$0xf]
        %v352 = vld [vmem:[%s279 + $0x3c] sm:$0xf]
        %v353 = vld [vmem:[%s321] sm:$0x1]
        %v355 = vlaneseq
        %v356 = vshrl.u32 %v355, 7
        %v357 = vsub.s32 0, %v356
        %v358 = vrot.slane %v353, %v357
        %v364 = vunpack.c.l.b16 %v333
        %v365 = vunpack.c.l.b16 %v334
        %v366 = vunpack.c.l.b16 %v335
        %v367 = vunpack.c.l.b16 %v336
        %v368 = vpack.c.b16 %v365, %v364
        %v369 = vpack.c.b16 %v367, %v366
        %v388 = vunpack.c.l.b16 %v337
        %v389 = vunpack.c.l.b16 %v338
        %v390 = vunpack.c.l.b16 %v339
        %v391 = vunpack.c.l.b16 %v340
        %v392 = vunpack.c.l.b16 %v341
        %v393 = vunpack.c.l.b16 %v342
        %v394 = vunpack.c.l.b16 %v343
        %v395 = vunpack.c.l.b16 %v344
        %v396 = vunpack.c.l.b16 %v345
        %v397 = vunpack.c.l.b16 %v346
        %v398 = vunpack.c.l.b16 %v347
        %v399 = vunpack.c.l.b16 %v348
        %v400 = vunpack.c.l.b16 %v349
        %v401 = vunpack.c.l.b16 %v350
        %v402 = vunpack.c.l.b16 %v351
        %v403 = vunpack.c.l.b16 %v352
        %v404 = vpack.c.b16 %v389, %v388
        %v405 = vpack.c.b16 %v391, %v390
        %v406 = vpack.c.b16 %v393, %v392
        %v407 = vpack.c.b16 %v395, %v394
        %v408 = vpack.c.b16 %v397, %v396
        %v409 = vpack.c.b16 %v399, %v398
        %v410 = vpack.c.b16 %v401, %v400
        %v411 = vpack.c.b16 %v403, %v402
        %420 = vmatprep.subr.bf16.mxu0 0
        %421 = vmatpush1.bf16.msra.mxu0 %v411
        %422 = vmatprep.subr.bf16.mxu0 0
        %423 = vmatpush1.bf16.msra.mxu0 %v410
        %424 = vmatprep.subr.bf16.mxu0 0
        %425 = vmatpush1.bf16.msra.mxu0 %v409
        %426 = vmatprep.subr.bf16.mxu0 0
        %427 = vmatpush1.bf16.msra.mxu0 %v408
        %428 = vmatprep.subr.bf16.mxu0 0
        %429 = vmatpush1.bf16.msra.mxu0 %v407
        %430 = vmatprep.subr.bf16.mxu0 0
        %431 = vmatpush1.bf16.msra.mxu0 %v406
        %432 = vmatprep.subr.bf16.mxu0 0
        %433 = vmatpush1.bf16.msra.mxu0 %v405
        %434 = vmatprep.subr.bf16.mxu0 0
        %435 = vmatpush1.bf16.msra.mxu0 %v404
        %436 = vmatprep.subr.bf16.mxu0 0
        %437 = vmatpush2.bf16.msra.mxu0 0
        %438 = vmatprep.subr.bf16.mxu0 0
        %439 = vmatpush2.bf16.msra.mxu0 0
        %440 = vmatprep.subr.bf16.mxu0 0
        %441 = vmatpush2.bf16.msra.mxu0 0
        %442 = vmatprep.subr.bf16.mxu0 0
        %443 = vmatpush2.bf16.msra.mxu0 0
        %444 = vmatprep.subr.bf16.mxu0 0
        %445 = vmatpush2.bf16.msra.mxu0 0
        %446 = vmatprep.subr.bf16.mxu0 0
        %447 = vmatpush2.bf16.msra.mxu0 0
        %448 = vmatprep.subr.bf16.mxu0 0
        %449 = vmatpush2.bf16.msra.mxu0 0
        %450 = vmatprep.subr.bf16.mxu0 0
        %451 = vmatpush2.bf16.msra.mxu0 0
        %452 = vmatprep.mubr.bf16.mxu0 0
        %453 = vmatmul.mubr.bf16.gmra.mxu0 %v368
        %v454 = vpop.f32.mrf.mxu0
        %v455 = vadd.f32 %v358, %v454
        %v456 = vpop.f32.mrf.mxu0
        %v457 = vpop.f32.mrf.mxu0
        %v458 = vadd.f32 %v358, %v457
        %v459 = vpop.f32.mrf.mxu0
        %460 = vmatprep.mubr.bf16.mxu0 0
        %461 = vmatmul.mubr.bf16.gmra.mxu0 %v369
        %v462 = vpop.f32.mrf.mxu0
        %v463 = vadd.f32 %v358, %v462
        %v464 = vpop.f32.mrf.mxu0
        %v465 = vpop.f32.mrf.mxu0
        %v466 = vadd.f32 %v358, %v465
        %v467 = vpop.f32.mrf.mxu0
        %468 = vdwg.mxu0
        %v469 = vmax.f32 %v455, 0.0
        %v470 = vmax.f32 %v458, 0.0
        %v471 = vmax.f32 %v463, 0.0
        %v472 = vmax.f32 %v466, 0.0
        %v473 = vld [vmem:[#allocation8] sm:$0xff]
        %v474 = vld [vmem:[#allocation8 + $0x8] sm:$0xff]
        %v475 = vld [vmem:[#allocation8 + $0x10] sm:$0xff]
        %v476 = vld [vmem:[#allocation8 + $0x18] sm:$0xff]
        %v477 = vpack.c.bf16 %v470, %v469
        %v478 = vpack.c.bf16 %v472, %v471
        %v479 = vld [vmem:[%s288] sm:$0xf]
        %v480 = vld [vmem:[%s288 + $0x4] sm:$0xf]
        %v481 = vld [vmem:[%s288 + $0x8] sm:$0xf]
        %v482 = vld [vmem:[%s288 + $0xc] sm:$0xf]
        %v483 = vld [vmem:[%s288 + $0x10] sm:$0xf]
        %v484 = vld [vmem:[%s288 + $0x14] sm:$0xf]
        %v485 = vld [vmem:[%s288 + $0x18] sm:$0xf]
        %v486 = vld [vmem:[%s288 + $0x1c] sm:$0xf]
        %v487 = vld [vmem:[%s288 + $0x20] sm:$0xf]
        %v488 = vld [vmem:[%s288 + $0x24] sm:$0xf]
        %v489 = vld [vmem:[%s288 + $0x28] sm:$0xf]
        %v490 = vld [vmem:[%s288 + $0x2c] sm:$0xf]
        %v491 = vld [vmem:[%s288 + $0x30] sm:$0xf]
        %v492 = vld [vmem:[%s288 + $0x34] sm:$0xf]
        %v493 = vld [vmem:[%s288 + $0x38] sm:$0xf]
        %v494 = vld [vmem:[%s288 + $0x3c] sm:$0xf]
        %v511 = vunpack.c.l.b16 %v479
        %v512 = vunpack.c.l.b16 %v480
        %v513 = vunpack.c.l.b16 %v481
        %v514 = vunpack.c.l.b16 %v482
        %v515 = vunpack.c.l.b16 %v483
        %v516 = vunpack.c.l.b16 %v484
        %v517 = vunpack.c.l.b16 %v485
        %v518 = vunpack.c.l.b16 %v486
        %v519 = vunpack.c.l.b16 %v487
        %v520 = vunpack.c.l.b16 %v488
        %v521 = vunpack.c.l.b16 %v489
        %v522 = vunpack.c.l.b16 %v490
        %v523 = vunpack.c.l.b16 %v491
        %v524 = vunpack.c.l.b16 %v492
        %v525 = vunpack.c.l.b16 %v493
        %v526 = vunpack.c.l.b16 %v494
        %v527 = vpack.c.b16 %v512, %v511
        %v528 = vpack.c.b16 %v514, %v513
        %v529 = vpack.c.b16 %v516, %v515
        %v530 = vpack.c.b16 %v518, %v517
        %v531 = vpack.c.b16 %v520, %v519
        %v532 = vpack.c.b16 %v522, %v521
        %v533 = vpack.c.b16 %v524, %v523
        %v534 = vpack.c.b16 %v526, %v525
        %543 = vmatprep.subr.bf16.mxu0 0
        %544 = vmatpush1.bf16.msra.mxu0 %v534
        %545 = vmatprep.subr.bf16.mxu0 0
        %546 = vmatpush1.bf16.msra.mxu0 %v533
        %547 = vmatprep.subr.bf16.mxu0 0
        %548 = vmatpush1.bf16.msra.mxu0 %v532
        %549 = vmatprep.subr.bf16.mxu0 0
        %550 = vmatpush1.bf16.msra.mxu0 %v531
        %551 = vmatprep.subr.bf16.mxu0 0
        %552 = vmatpush1.bf16.msra.mxu0 %v530
        %553 = vmatprep.subr.bf16.mxu0 0
        %554 = vmatpush1.bf16.msra.mxu0 %v529
        %555 = vmatprep.subr.bf16.mxu0 0
        %556 = vmatpush1.bf16.msra.mxu0 %v528
        %557 = vmatprep.subr.bf16.mxu0 0
        %558 = vmatpush1.bf16.msra.mxu0 %v527
        %559 = vmatprep.subr.bf16.mxu0 0
        %560 = vmatpush2.bf16.msra.mxu0 0
        %561 = vmatprep.subr.bf16.mxu0 0
        %562 = vmatpush2.bf16.msra.mxu0 0
        %563 = vmatprep.subr.bf16.mxu0 0
        %564 = vmatpush2.bf16.msra.mxu0 0
        %565 = vmatprep.subr.bf16.mxu0 0
        %566 = vmatpush2.bf16.msra.mxu0 0
        %567 = vmatprep.subr.bf16.mxu0 0
        %568 = vmatpush2.bf16.msra.mxu0 0
        %569 = vmatprep.subr.bf16.mxu0 0
        %570 = vmatpush2.bf16.msra.mxu0 0
        %571 = vmatprep.subr.bf16.mxu0 0
        %572 = vmatpush2.bf16.msra.mxu0 0
        %573 = vmatprep.subr.bf16.mxu0 0
        %574 = vmatpush2.bf16.msra.mxu0 0
        %575 = vmatprep.mubr.bf16.mxu0 0
        %576 = vmatmul.mubr.bf16.gmra.mxu0 %v477
        %v577 = vpop.f32.mrf.mxu0
        %v578 = vadd.f32 0.0, %v577
        %v579 = vpop.f32.mrf.mxu0
        %v580 = vpop.f32.mrf.mxu0
        %v581 = vadd.f32 0.0, %v580
        %v582 = vpop.f32.mrf.mxu0
        %583 = vmatprep.mubr.bf16.mxu0 0
        %584 = vmatmul.mubr.bf16.gmra.mxu0 %v478
        %v585 = vpop.f32.mrf.mxu0
        %v586 = vadd.f32 0.0, %v585
        %v587 = vpop.f32.mrf.mxu0
        %v588 = vpop.f32.mrf.mxu0
        %v589 = vadd.f32 0.0, %v588
        %v590 = vpop.f32.mrf.mxu0
        %591 = vdwg.mxu0
        %v592 = vadd.f32 %v473, %v578
        %v593 = vadd.f32 %v474, %v581
        %v594 = vadd.f32 %v475, %v586
        %v595 = vadd.f32 %v476, %v589
        %596 = vst [vmem:[#allocation8] sm:$0xff] %v592
        %597 = vst [vmem:[#allocation8 + $0x8] sm:$0xff] %v593
        %598 = vst [vmem:[#allocation8 + $0x10] sm:$0xff] %v594
        %599 = vst [vmem:[#allocation8 + $0x18] sm:$0xff] %v595
        %p600 = scmp.eq.s32.totalorder %s26, 1
        // Predicated region
        $region57: #{tpu_custom_call.1} parent=39 // pred_check
          %p601 = pneg %p600
        $region58: #{tpu_custom_call.1} parent=39 // pred_check_branch
          %603 = sbr.rel (%p601) target = $region60
        $region59: #{tpu_custom_call.1} parent=39 // pred_region
          %v604 = vld [vmem:[#allocation8] sm:$0xff]
          %v605 = vld [vmem:[#allocation8 + $0x8] sm:$0xff]
          %v606 = vld [vmem:[#allocation8 + $0x10] sm:$0xff]
          %v607 = vld [vmem:[#allocation8 + $0x18] sm:$0xff]
          %v608 = vld [vmem:[%s4] sm:$0x1]
          %v610 = vlaneseq
          %v611 = vshrl.u32 %v610, 7
          %v612 = vsub.s32 0, %v611
          %v613 = vrot.slane %v608, %v612
          %v615 = vadd.f32 %v604, %v613
          %v616 = vadd.f32 %v605, %v613
          %v617 = vadd.f32 %v606, %v613
          %v618 = vadd.f32 %v607, %v613
          %619 = vst [vmem:[#allocation8] sm:$0xff] %v615
          %620 = vst [vmem:[#allocation8 + $0x8] sm:$0xff] %v616
          %621 = vst [vmem:[#allocation8 + $0x10] sm:$0xff] %v617
          %622 = vst [vmem:[#allocation8 + $0x18] sm:$0xff] %v618
        $region60: #{tpu_custom_call.1} parent=39 // pred_fallthru
          _
        // Predicated region
        $region61: #{tpu_custom_call.1} parent=39 // pred_check
          %p623 = pneg %p176
        $region62: #{tpu_custom_call.1} parent=39 // pred_check_branch
          %625 = sbr.rel (%p623) target = $region64
        $region63: #{tpu_custom_call.1} parent=39 // pred_region
          %s626 = smul.u32 4, %s25
          %s628 = ssub.s32 512, 512
          %629 = vsyncadd [#allocation4], %s628
          %s630 = smul.addr %s626, 128
          %s631 = scalar_lea.hbm %s5, %s630
          %s632 = sshll.u32 [#allocation8], 4
          %s633 = int_to_ptr.vmem [resolvable:$true] %s632
          %638 = dma.vmem_to_hbm [thread:$0]  %s633, 512, %s631, [#allocation4], 128, 128, 8
        $region64: #{tpu_custom_call.1} parent=39 // pred_fallthru
          _
        // Predicated region
        $region65: #{tpu_custom_call.1} parent=39 // pred_check
          %p639 = pneg %p176
        $region66: #{tpu_custom_call.1} parent=39 // pred_check_branch
          %641 = sbr.rel (%p639) target = $region68
        $region67: #{tpu_custom_call.1} parent=39 // pred_region
          %642 = dma.done [#allocation4], 512
        $region68: #{tpu_custom_call.1} parent=39 // pred_fallthru
          _
      $region40: #{tpu_custom_call.1} parent=5 // pred_fallthru
        _
      %p643 = scmp.le.s32.totalorder 2, %s16
      // Predicated region
      $region69: #{tpu_custom_call.1} parent=5 // pred_check
        %p644 = pneg %p643
      $region70: #{tpu_custom_call.1} parent=5 // pred_check_branch
        %646 = sbr.rel (%p644) target = $region72
      $region71: #{tpu_custom_call.1} parent=5 // pred_region
        %s647 = ssub.s32 %s16, 2
      $region72: #{tpu_custom_call.1} parent=5 // pred_fallthru
        _
    $region6: #{tpu_custom_call.1} parent=1 // loop_footer
      %s20 = sadd.s32 1, %s16
    $region7: #{tpu_custom_call.1} parent=1 // loop_footer_branch
      %15 = sbr.rel target = $region3
    $region8: #{tpu_custom_call.1} parent=1 // loop_exit
      _
    %648 = vsyncpa [#allocation3], 1
    %s649 = scalar_lea.sflag [#allocation3], 1
    %650 = vsyncpa %s649, 1
    %651 = vsyncpa [#allocation6], 1
    %s652 = scalar_lea.sflag [#allocation6], 1
    %653 = vsyncpa %s652, 1
    %654 = vsyncpa [#allocation4], 1
    %s655 = scalar_lea.sflag [#allocation4], 1
    %656 = vsyncpa %s655, 1

</llo_original>
